<compile_context>
chip_gen: v6e
topology: v6e:2x2x1
jax: 0.10.0
libtpu: 0.0.40
codegen_flags: <defaults>
</compile_context>

<pallas_src>
import jax
import jax.numpy as jnp
from jax.experimental import pallas as pl
from jax.experimental.pallas import tpu as pltpu


def fcnn_kernel(xT_ref, w1T_ref, b1_ref, w2T_ref, o_ref):
    # ---- layer 1: h^T = ReLU(w1^T x^T + b1), done on the VPU in f32 ----
    # K (= input_dim) is tiny (4): 4 unrolled broadcast multiply-adds.
    #   w1T[:, k:k+1] : (H, 1)  broadcast across TB lanes
    #   xT[k:k+1, :]  : (1, TB) broadcast across H sublanes
    xT = xT_ref[...]                                   # (K, TB)  f32
    w1T = w1T_ref[...]                                 # (H, K)   f32
    acc = b1_ref[...] + w1T[:, 0:1] * xT[0:1, :]       # (H, TB)  f32
    for k in range(1, xT.shape[0]):                    # static, unrolled (K=4)
        acc = acc + w1T[:, k:k + 1] * xT[k:k + 1, :]
    hT = jnp.maximum(acc, 0.0)                         # ReLU in f32

    # ---- layer 2: out^T = w2^T h^T on the MXU, f32 accumulation ----
    # (C_pad, H) @ (H, TB) -> (C_pad, TB): classes padded only to 8 sublanes.
    outT = jnp.dot(w2T_ref[...], hT.astype(w2T_ref.dtype),
                   preferred_element_type=jnp.float32)
    o_ref[...] = outT.astype(o_ref.dtype)


def _round_up(n, m):
    return ((n + m - 1) // m) * m


def fcnn_forward(x, w1, b1, w2, *, block_b=2048, matmul_dtype=jnp.bfloat16):
    """Forward pass matching PyTorch FCNN.

    x:  (B, input_dim) float32
    w1: (input_dim, hidden)   -- transposed PyTorch layer1.weight
    b1: (1, hidden) or (hidden,)
    w2: (hidden, num_classes) -- transposed PyTorch layer2.weight
    Returns (B, num_classes) float32.
    """
    assert block_b % 128 == 0 and block_b >= 128
    B, K = x.shape
    Kw, H = w1.shape
    assert Kw == K
    Hw, C = w2.shape
    assert Hw == H

    # Batch lives in the lane dim now -> tile must be a multiple of 128.
    B_ru = _round_up(B, 128)
    TB = min(block_b, B_ru)
    # Prefer >= 2 grid steps so v7x can shard the batch axis across both TCs.
    if TB == B_ru and B_ru >= 256:
        TB = _round_up(B_ru // 2, 128)
    B_pad = _round_up(B, TB)
    grid = (B_pad // TB,)

    # Classes padded to 8 *sublanes* (not 128 lanes).
    C_pad = _round_up(C, 8)

    # Layer-1 operands stay f32; only layer-2 operands (h, w2) use matmul_dtype.
    xT = jnp.pad(x, ((0, B_pad - B), (0, 0))).astype(jnp.float32).T   # (K, B_pad)
    w1T = w1.T.astype(jnp.float32)                                    # (H, K)
    b1c = b1.reshape(H, 1).astype(jnp.float32)                        # (H, 1)
    w2T = jnp.pad(w2.T, ((0, C_pad - C), (0, 0))).astype(matmul_dtype)  # (C_pad, H)

    w2_isz = jnp.dtype(matmul_dtype).itemsize
    cost = pl.CostEstimate(
        flops=2 * B_pad * (K * H + H * C_pad),
        transcendentals=0,
        bytes_accessed=(K * B_pad * 4 + H * K * 4 + H * 4
                        + C_pad * H * w2_isz + C_pad * B_pad * 4),
    )

    outT = pl.pallas_call(
        fcnn_kernel,
        out_shape=jax.ShapeDtypeStruct((C_pad, B_pad), jnp.float32),
        grid_spec=pltpu.PrefetchScalarGridSpec(
            num_scalar_prefetch=0,
            grid=grid,
            in_specs=[
                pl.BlockSpec((K, TB), lambda i: (0, i)),       # x^T: tiled over batch (lanes)
                pl.BlockSpec((H, K), lambda i: (0, 0)),        # w1^T: resident
                pl.BlockSpec((H, 1), lambda i: (0, 0)),        # b1:   resident
                pl.BlockSpec((C_pad, H), lambda i: (0, 0)),    # w2^T (sublane-padded): resident
            ],
            out_specs=pl.BlockSpec((C_pad, TB), lambda i: (0, i)),
        ),
        compiler_params=pltpu.CompilerParams(
            dimension_semantics=("parallel",),                 # v7x: shard batch over 2 TCs
        ),
        cost_estimate=cost,
    )(xT, w1T, b1c, w2T)

    # (C_pad, B_pad) is tiny (8 x B_pad): this slice/transpose is negligible.
    return outT[:C, :B].T


if __name__ == "__main__":
    input_dim, hidden_dim, num_classes = 4, 256, 2
    batch = 200   # not a multiple of 128 -> exercises padding + a 2-step grid

    key = jax.random.PRNGKey(0)
    kx, k1, kb, k2 = jax.random.split(key, 4)

    # Deterministic synthetic params (PyTorch-style uniform init bounds).
    bound1 = 1.0 / (input_dim ** 0.5)
    bound2 = 1.0 / (hidden_dim ** 0.5)
    # PyTorch layer1.weight is (hidden, in); we keep the transposed (in, hidden) layout.
    w1 = jax.random.uniform(k1, (input_dim, hidden_dim), jnp.float32, -bound1, bound1)
    b1 = jax.random.uniform(kb, (1, hidden_dim), jnp.float32, -bound1, bound1)
    # PyTorch layer2.weight is (num_classes, hidden); transposed -> (hidden, num_classes).
    w2 = jax.random.uniform(k2, (hidden_dim, num_classes), jnp.float32, -bound2, bound2)

    x = jax.random.normal(kx, (batch, input_dim), jnp.float32)

    # Pure-JAX reference (exact semantics of the PyTorch module).
    ref = jnp.maximum(x @ w1 + b1, 0.0) @ w2

    # f32 layer-2 path: parity check against the reference.
    out_f32 = jax.block_until_ready(
        fcnn_forward(x, w1, b1, w2, matmul_dtype=jnp.float32))
    assert out_f32.shape == (batch, num_classes)
    assert jnp.allclose(out_f32, ref, atol=1e-4, rtol=1e-4), \
        float(jnp.max(jnp.abs(out_f32 - ref)))

    # bf16 layer-2 operands (default; recommended on v6e/v7x), f32 accumulation.
    out_bf16 = jax.block_until_ready(fcnn_forward(x, w1, b1, w2))
    assert out_bf16.shape == (batch, num_classes)
    assert jnp.allclose(out_bf16, ref, atol=5e-2, rtol=5e-2)

    print("KERNEL_OK")
</pallas_src>

<mosaic_0001>
module attributes {stable_mosaic.version = 11 : i64} {
  func.func @fcnn_kernel(%arg0: i32, %arg1: memref<4x128xf32, #tpu.memory_space<vmem>>, %arg2: memref<256x4xf32, #tpu.memory_space<vmem>>, %arg3: memref<256x1xf32, #tpu.memory_space<vmem>>, %arg4: memref<8x256xf32, #tpu.memory_space<vmem>>, %arg5: memref<8x128xf32, #tpu.memory_space<vmem>>) attributes {dimension_semantics = [#tpu.dimension_semantics<parallel>], iteration_bounds = array<i64: 2>, scalar_prefetch = 0 : i64, scratch_operands = 0 : i64, tpu.core_type = #tpu.core_type<tc>, window_params = [{transform_indices = @transform_0, window_bounds = array<i64: 4, 128>}, {pipeline_mode = #tpu.pipeline_mode<synchronous>, transform_indices = @transform_1, window_bounds = array<i64: 256, 4>}, {pipeline_mode = #tpu.pipeline_mode<synchronous>, transform_indices = @transform_2, window_bounds = array<i64: 256, 1>}, {pipeline_mode = #tpu.pipeline_mode<synchronous>, transform_indices = @transform_3, window_bounds = array<i64: 8, 256>}, {transform_indices = @transform_4, window_bounds = array<i64: 8, 128>}]} {
    %c0 = arith.constant 0 : index
    %c0_0 = arith.constant 0 : index
    %0 = vector.load %arg1[%c0, %c0_0] : memref<4x128xf32, #tpu.memory_space<vmem>>, vector<4x128xf32>
    %c0_1 = arith.constant 0 : index
    %c0_2 = arith.constant 0 : index
    %1 = vector.load %arg2[%c0_1, %c0_2] : memref<256x4xf32, #tpu.memory_space<vmem>>, vector<256x4xf32>
    %c0_3 = arith.constant 0 : index
    %c0_4 = arith.constant 0 : index
    %2 = vector.load %arg3[%c0_3, %c0_4] : memref<256x1xf32, #tpu.memory_space<vmem>>, vector<256x1xf32>
    %3 = vector.extract_strided_slice %1 {offsets = [0, 0], sizes = [256, 1], strides = [1, 1]} : vector<256x4xf32> to vector<256x1xf32>
    %4 = vector.extract_strided_slice %0 {offsets = [0, 0], sizes = [1, 128], strides = [1, 1]} : vector<4x128xf32> to vector<1x128xf32>
    %5 = vector.broadcast %3 : vector<256x1xf32> to vector<256x128xf32>
    %6 = vector.broadcast %4 : vector<1x128xf32> to vector<256x128xf32>
    %7 = arith.mulf %5, %6 : vector<256x128xf32>
    %8 = vector.broadcast %2 : vector<256x1xf32> to vector<256x128xf32>
    %9 = arith.addf %8, %7 : vector<256x128xf32>
    %10 = vector.extract_strided_slice %1 {offsets = [0, 1], sizes = [256, 1], strides = [1, 1]} : vector<256x4xf32> to vector<256x1xf32>
    %11 = vector.extract_strided_slice %0 {offsets = [1, 0], sizes = [1, 128], strides = [1, 1]} : vector<4x128xf32> to vector<1x128xf32>
    %12 = vector.broadcast %10 : vector<256x1xf32> to vector<256x128xf32>
    %13 = vector.broadcast %11 : vector<1x128xf32> to vector<256x128xf32>
    %14 = arith.mulf %12, %13 : vector<256x128xf32>
    %15 = arith.addf %9, %14 : vector<256x128xf32>
    %16 = vector.extract_strided_slice %1 {offsets = [0, 2], sizes = [256, 1], strides = [1, 1]} : vector<256x4xf32> to vector<256x1xf32>
    %17 = vector.extract_strided_slice %0 {offsets = [2, 0], sizes = [1, 128], strides = [1, 1]} : vector<4x128xf32> to vector<1x128xf32>
    %18 = vector.broadcast %16 : vector<256x1xf32> to vector<256x128xf32>
    %19 = vector.broadcast %17 : vector<1x128xf32> to vector<256x128xf32>
    %20 = arith.mulf %18, %19 : vector<256x128xf32>
    %21 = arith.addf %15, %20 : vector<256x128xf32>
    %22 = vector.extract_strided_slice %1 {offsets = [0, 3], sizes = [256, 1], strides = [1, 1]} : vector<256x4xf32> to vector<256x1xf32>
    %23 = vector.extract_strided_slice %0 {offsets = [3, 0], sizes = [1, 128], strides = [1, 1]} : vector<4x128xf32> to vector<1x128xf32>
    %24 = vector.broadcast %22 : vector<256x1xf32> to vector<256x128xf32>
    %25 = vector.broadcast %23 : vector<1x128xf32> to vector<256x128xf32>
    %26 = arith.mulf %24, %25 : vector<256x128xf32>
    %27 = arith.addf %21, %26 : vector<256x128xf32>
    %cst = arith.constant 0.000000e+00 : f32
    %28 = vector.broadcast %cst : f32 to vector<256x128xf32>
    %29 = arith.maximumf %27, %28 : vector<256x128xf32>
    %c0_5 = arith.constant 0 : index
    %c0_6 = arith.constant 0 : index
    %30 = vector.load %arg4[%c0_5, %c0_6] : memref<8x256xf32, #tpu.memory_space<vmem>>, vector<8x256xf32>
    %cst_7 = arith.constant dense<0.000000e+00> : vector<8x128xf32>
    %31 = tpu.matmul %30, %29, %cst_7 {dimension_numbers = #tpu.dot_dimension_numbers<[1], [0], [0], [1], [0, 0, 1, 1], [], []>} : vector<8x256xf32>, vector<256x128xf32>, vector<8x128xf32> -> vector<8x128xf32>
    %c0_8 = arith.constant 0 : index
    %c0_9 = arith.constant 0 : index
    %32 = vector.load %arg5[%c0_8, %c0_9] : memref<8x128xf32, #tpu.memory_space<vmem>>, vector<8x128xf32>
    tpu.vector_store %arg5[%c0_8, %c0_9], %31 {strides = array<i32>} : memref<8x128xf32, #tpu.memory_space<vmem>>, vector<8x128xf32>,
    return
  }
  func.func @transform_0(%arg0: i32) -> (i32, i32) {
    %c0_i32 = arith.constant 0 : i32
    %c0_i32_0 = arith.constant 0 : i32
    return %c0_i32, %arg0 : i32, i32
  }
  func.func @transform_1(%arg0: i32) -> (i32, i32) {
    %c0_i32 = arith.constant 0 : i32
    %c0_i32_0 = arith.constant 0 : i32
    %c0_i32_1 = arith.constant 0 : i32
    return %c0_i32, %c0_i32_0 : i32, i32
  }
  func.func @transform_2(%arg0: i32) -> (i32, i32) {
    %c0_i32 = arith.constant 0 : i32
    %c0_i32_0 = arith.constant 0 : i32
    %c0_i32_1 = arith.constant 0 : i32
    return %c0_i32, %c0_i32_0 : i32, i32
  }
  func.func @transform_3(%arg0: i32) -> (i32, i32) {
    %c0_i32 = arith.constant 0 : i32
    %c0_i32_0 = arith.constant 0 : i32
    %c0_i32_1 = arith.constant 0 : i32
    return %c0_i32, %c0_i32_0 : i32, i32
  }
  func.func @transform_4(%arg0: i32) -> (i32, i32) {
    %c0_i32 = arith.constant 0 : i32
    %c0_i32_0 = arith.constant 0 : i32
    return %c0_i32, %arg0 : i32, i32
  }
}

</mosaic_0001>

<llo_original>
// kernel: tpu_custom_call.1
$region0: #{tpu_custom_call.1}
  #allocation0 [shape = 'u32[]', space=smem, size = 0x4, offset = 0x4, fixed_abs, tag = 'smem constant byte address 0x4 - core index']
  #allocation1 [shape = 'u32[144,128]{1,0:T(1,128)}', space=vmem, size = 0x12000, scoped, tag = 'internal scratch']
  %s0 = inlined_call_operand.vmem [shape: f32[4,256], index: 0, kind: input, shape index: {}]
  %s1 = inlined_call_operand.vmem [shape: f32[256,4], index: 1, kind: input, shape index: {}]
  %s2 = inlined_call_operand.vmem [shape: f32[256,1], index: 2, kind: input, shape index: {}]
  %s3 = inlined_call_operand.vmem [shape: f32[8,256], index: 3, kind: input, shape index: {}]
  %s4 = inlined_call_operand.hbm [shape: f32[8,256], index: 4, kind: output, shape index: {}]
  %s5 = sld [smem:[#allocation0]]
  $region49: #{tpu_custom_call.1} parent=0
    _
  %s7 = ssub.s32 1, %s5
  %s8 = scalar_select 0, %s7, %s5
  $region1: #{tpu_custom_call.1} parent=0
    #allocation2 [shape = 'u8[8192]{0}', space=vmem, size = 0x2000, scoped, tag = 'output window, operand 0']
    #allocation3 [shape = 's32[2]{0}', space=sflag, size = 0x8, scoped, tag = 'scoped memory for tpu_custom_call.1']
    %9 = vsyncpa [#allocation3], 0
    %s10 = scalar_lea.sflag [#allocation3], 1
    %11 = vsyncpa %s10, 0
    loop: start=0, step=1, limit=4
    $region2: #{tpu_custom_call.1} parent=1 // loop_pre_header
      _
    $region3: #{tpu_custom_call.1} parent=1 // loop_header
      %s13 = sphi 0, %s17
      %p14 = scmp.ge.s32.totalorder %s13, 4
      %s23 = sphi 0, %s25
      %s26 = sphi 0, %s23
      %s27 = sphi 0, %s26
      %s43 = sphi 0, %s27
      %s47 = sphi 0, %s47
      %s49 = sphi 0, %s47
      %s50 = sphi 0, %s49
      %s64 = sphi 0, %s50
      %s68 = sphi 0, %s68
      %s70 = sphi 0, %s68
      %s71 = sphi 0, %s70
      %s85 = sphi 0, %s71
      %s89 = sphi 0, %s89
      %s91 = sphi 0, %s89
      %s92 = sphi 0, %s91
      %s106 = sphi 0, %s92
      %s112 = sphi 0, %s114
      %s115 = sphi 0, %s112
      %s116 = sphi 0, %s115
      %s132 = sphi 0, %s116
    $region4: #{tpu_custom_call.1} parent=1 // loop_header_branch
      %16 = sbr.rel (%p14) target = $region8
    $region5: #{tpu_custom_call.1} parent=1 // loop_body
      %s18 = ssub.s32 %s13, 1
      %s19 = ssub.s32 %s13, 2
      %s20 = sadd.s32 %s13, 1
      %s21 = ssub.s32 %s13, %s20
      %p22 = scmp.eq.s32.totalorder %s21, 0
      %s24 = sadd.s32 %s23, 1
      %s25 = scalar_select %p22, %s23, %s24
      %p28 = pneg %p22
      %p29 = scmp.eq.s32.totalorder %s13, 1
      %p30 = por %p28, %p29
      %p31 = scmp.ne.s32.totalorder %s23, %s26
      %p32 = scmp.eq.s32.totalorder %s13, 0
      %p33 = por %p31, %p32
      %p34 = scmp.ne.s32.totalorder %s23, %s26
      %p35 = scmp.eq.s32.totalorder %s18, 1
      %p36 = por %p34, %p35
      %p37 = scmp.ne.s32.totalorder %s26, %s27
      %p38 = scmp.eq.s32.totalorder %s18, 0
      %p39 = por %p37, %p38
      %p40 = scmp.ne.s32.totalorder %s26, %s27
      %p41 = scmp.eq.s32.totalorder %s19, 1
      %p42 = por %p40, %p41
      %p44 = scmp.ne.s32.totalorder %s27, %s43
      %p45 = scmp.eq.s32.totalorder %s19, 0
      %p46 = por %p44, %p45
      %s48 = sadd.s32 %s47, 1
      %p51 = scmp.eq.s32.totalorder %s13, 1
      %p52 = scmp.ne.s32.totalorder %s47, %s49
      %p53 = scmp.eq.s32.totalorder %s13, 0
      %p54 = por %p52, %p53
      %p55 = scmp.ne.s32.totalorder %s47, %s49
      %p56 = scmp.eq.s32.totalorder %s18, 1
      %p57 = por %p55, %p56
      %p58 = scmp.ne.s32.totalorder %s49, %s50
      %p59 = scmp.eq.s32.totalorder %s18, 0
      %p60 = por %p58, %p59
      %p61 = scmp.ne.s32.totalorder %s49, %s50
      %p62 = scmp.eq.s32.totalorder %s19, 1
      %p63 = por %p61, %p62
      %p65 = scmp.ne.s32.totalorder %s50, %s64
      %p66 = scmp.eq.s32.totalorder %s19, 0
      %p67 = por %p65, %p66
      %s69 = sadd.s32 %s68, 1
      %p72 = scmp.eq.s32.totalorder %s13, 1
      %p73 = scmp.ne.s32.totalorder %s68, %s70
      %p74 = scmp.eq.s32.totalorder %s13, 0
      %p75 = por %p73, %p74
      %p76 = scmp.ne.s32.totalorder %s68, %s70
      %p77 = scmp.eq.s32.totalorder %s18, 1
      %p78 = por %p76, %p77
      %p79 = scmp.ne.s32.totalorder %s70, %s71
      %p80 = scmp.eq.s32.totalorder %s18, 0
      %p81 = por %p79, %p80
      %p82 = scmp.ne.s32.totalorder %s70, %s71
      %p83 = scmp.eq.s32.totalorder %s19, 1
      %p84 = por %p82, %p83
      %p86 = scmp.ne.s32.totalorder %s71, %s85
      %p87 = scmp.eq.s32.totalorder %s19, 0
      %p88 = por %p86, %p87
      %s90 = sadd.s32 %s89, 1
      %p93 = scmp.eq.s32.totalorder %s13, 1
      %p94 = scmp.ne.s32.totalorder %s89, %s91
      %p95 = scmp.eq.s32.totalorder %s13, 0
      %p96 = por %p94, %p95
      %p97 = scmp.ne.s32.totalorder %s89, %s91
      %p98 = scmp.eq.s32.totalorder %s18, 1
      %p99 = por %p97, %p98
      %p100 = scmp.ne.s32.totalorder %s91, %s92
      %p101 = scmp.eq.s32.totalorder %s18, 0
      %p102 = por %p100, %p101
      %p103 = scmp.ne.s32.totalorder %s91, %s92
      %p104 = scmp.eq.s32.totalorder %s19, 1
      %p105 = por %p103, %p104
      %p107 = scmp.ne.s32.totalorder %s92, %s106
      %p108 = scmp.eq.s32.totalorder %s19, 0
      %p109 = por %p107, %p108
      %s110 = ssub.s32 %s13, %s20
      %p111 = scmp.eq.s32.totalorder %s110, 0
      %s113 = sadd.s32 %s112, 1
      %s114 = scalar_select %p111, %s112, %s113
      %p117 = pneg %p111
      %p118 = scmp.eq.s32.totalorder %s13, 1
      %p119 = por %p117, %p118
      %p120 = scmp.ne.s32.totalorder %s112, %s115
      %p121 = scmp.eq.s32.totalorder %s13, 0
      %p122 = por %p120, %p121
      %p123 = scmp.ne.s32.totalorder %s112, %s115
      %p124 = scmp.eq.s32.totalorder %s18, 1
      %p125 = por %p123, %p124
      %p126 = scmp.ne.s32.totalorder %s115, %s116
      %p127 = scmp.eq.s32.totalorder %s18, 0
      %p128 = por %p126, %p127
      %p129 = scmp.ne.s32.totalorder %s115, %s116
      %p130 = scmp.eq.s32.totalorder %s19, 1
      %p131 = por %p129, %p130
      %p133 = scmp.ne.s32.totalorder %s116, %s132
      %p134 = scmp.eq.s32.totalorder %s19, 0
      %p135 = por %p133, %p134
      %p136 = scmp.le.s32.totalorder 1, %s13
      %p137 = scmp.lt.s32.totalorder %s13, 3
      %p138 = pnand %p136, %p137
      %p139 = pneg %p138
      // Predicated region
      $region9: #{tpu_custom_call.1} parent=5 // pred_check
        _
      $region10: #{tpu_custom_call.1} parent=5 // pred_check_branch
        %141 = sbr.rel (%p138) target = $region12
      $region11: #{tpu_custom_call.1} parent=5 // pred_region
        %s142 = ssub.s32 %s13, 1
        // Predicated region
        $region13: #{tpu_custom_call.1} parent=11 // pred_check
          %p143 = pneg %p60
        $region14: #{tpu_custom_call.1} parent=11 // pred_check_branch
          %145 = sbr.rel (%p143) target = $region16
        $region15: #{tpu_custom_call.1} parent=11 // pred_region
          _
        $region16: #{tpu_custom_call.1} parent=11 // pred_fallthru
          _
        // Predicated region
        $region17: #{tpu_custom_call.1} parent=11 // pred_check
          %p146 = pneg %p81
        $region18: #{tpu_custom_call.1} parent=11 // pred_check_branch
          %148 = sbr.rel (%p146) target = $region20
        $region19: #{tpu_custom_call.1} parent=11 // pred_region
          _
        $region20: #{tpu_custom_call.1} parent=11 // pred_fallthru
          _
        // Predicated region
        $region21: #{tpu_custom_call.1} parent=11 // pred_check
          %p149 = pneg %p102
        $region22: #{tpu_custom_call.1} parent=11 // pred_check_branch
          %151 = sbr.rel (%p149) target = $region24
        $region23: #{tpu_custom_call.1} parent=11 // pred_region
          _
        $region24: #{tpu_custom_call.1} parent=11 // pred_fallthru
          _
      $region12: #{tpu_custom_call.1} parent=5 // pred_fallthru
        _
      %p152 = scmp.lt.s32.totalorder %s13, 2
      // Predicated region
      $region25: #{tpu_custom_call.1} parent=5 // pred_check
        %p153 = pneg %p152
      $region26: #{tpu_custom_call.1} parent=5 // pred_check_branch
        %155 = sbr.rel (%p153) target = $region28
      $region27: #{tpu_custom_call.1} parent=5 // pred_region
        // Predicated region
        $region29: #{tpu_custom_call.1} parent=27 // pred_check
          %p156 = pneg %p33
        $region30: #{tpu_custom_call.1} parent=27 // pred_check_branch
          %158 = sbr.rel (%p156) target = $region32
        $region31: #{tpu_custom_call.1} parent=27 // pred_region
          %p159 = scmp.lt.s32.totalorder %s13, 1
          %s160 = scalar_select %p159, %s13, 1
          %s161 = smul.addr %s160, 4
          %s162 = scalar_lea.vmem %s0, %s161
        $region32: #{tpu_custom_call.1} parent=27 // pred_fallthru
          _
      $region28: #{tpu_custom_call.1} parent=5 // pred_fallthru
        _
      %p163 = scmp.le.s32.totalorder 1, %s13
      %p164 = scmp.lt.s32.totalorder %s13, 3
      %p165 = pnand %p163, %p164
      %p166 = pneg %p165
      // Predicated region
      $region33: #{tpu_custom_call.1} parent=5 // pred_check
        _
      $region34: #{tpu_custom_call.1} parent=5 // pred_check_branch
        %168 = sbr.rel (%p165) target = $region36
      $region35: #{tpu_custom_call.1} parent=5 // pred_region
        %s169 = ssub.s32 %s13, 1
        %p170 = scmp.lt.s32.totalorder %s18, 1
        %s171 = scalar_select %p170, %s18, 1
        %s172 = smul.addr %s171, 4
        %s173 = scalar_lea.vmem %s0, %s172
        %p174 = pneg %p39
        %p175 = pneg %p36
        %p176 = pneg %p60
        %p177 = pneg %p57
        %p178 = pneg %p81
        %p179 = pneg %p78
        %p180 = pneg %p102
        %p181 = pneg %p99
        %p182 = pneg %p128
        %p183 = pneg %p125
        %s184 = sand.u32 %s115, 1
        %s185 = scalar_lea.sflag [#allocation3], %s184
        %s186 = sand.u32 %s115, 1
        %s187 = smul.addr %s186, 8
        %s188 = scalar_lea.vmem [#allocation2], %s187
        %p189 = scmp.lt.s32.totalorder %s18, 1
        %s190 = scalar_select %p189, %s18, 1
        %s191 = smul.addr %s190, 4
        %s192 = scalar_lea.vmem %s0, %s191
        %v193 = vld [vmem:[%s192] sm:$0xf]
        %v194 = vld [vmem:[%s1] sm:$0xff]
        %v195 = vld [vmem:[%s1 + $0x8] sm:$0xff]
        %v196 = vld [vmem:[%s1 + $0x10] sm:$0xff]
        %v197 = vld [vmem:[%s1 + $0x18] sm:$0xff]
        %v198 = vld [vmem:[%s1 + $0x20] sm:$0xff]
        %v199 = vld [vmem:[%s1 + $0x28] sm:$0xff]
        %v200 = vld [vmem:[%s1 + $0x30] sm:$0xff]
        %v201 = vld [vmem:[%s1 + $0x38] sm:$0xff]
        %v202 = vld [vmem:[%s1 + $0x40] sm:$0xff]
        %v203 = vld [vmem:[%s1 + $0x48] sm:$0xff]
        %v204 = vld [vmem:[%s1 + $0x50] sm:$0xff]
        %v205 = vld [vmem:[%s1 + $0x58] sm:$0xff]
        %v206 = vld [vmem:[%s1 + $0x60] sm:$0xff]
        %v207 = vld [vmem:[%s1 + $0x68] sm:$0xff]
        %v208 = vld [vmem:[%s1 + $0x70] sm:$0xff]
        %v209 = vld [vmem:[%s1 + $0x78] sm:$0xff]
        %v210 = vld [vmem:[%s1 + $0x80] sm:$0xff]
        %v211 = vld [vmem:[%s1 + $0x88] sm:$0xff]
        %v212 = vld [vmem:[%s1 + $0x90] sm:$0xff]
        %v213 = vld [vmem:[%s1 + $0x98] sm:$0xff]
        %v214 = vld [vmem:[%s1 + $0xa0] sm:$0xff]
        %v215 = vld [vmem:[%s1 + $0xa8] sm:$0xff]
        %v216 = vld [vmem:[%s1 + $0xb0] sm:$0xff]
        %v217 = vld [vmem:[%s1 + $0xb8] sm:$0xff]
        %v218 = vld [vmem:[%s1 + $0xc0] sm:$0xff]
        %v219 = vld [vmem:[%s1 + $0xc8] sm:$0xff]
        %v220 = vld [vmem:[%s1 + $0xd0] sm:$0xff]
        %v221 = vld [vmem:[%s1 + $0xd8] sm:$0xff]
        %v222 = vld [vmem:[%s1 + $0xe0] sm:$0xff]
        %v223 = vld [vmem:[%s1 + $0xe8] sm:$0xff]
        %v224 = vld [vmem:[%s1 + $0xf0] sm:$0xff]
        %v225 = vld [vmem:[%s1 + $0xf8] sm:$0xff]
        %v226 = vld [vmem:[%s2] sm:$0xff]
        %v227 = vld [vmem:[%s2 + $0x8] sm:$0xff]
        %v228 = vld [vmem:[%s2 + $0x10] sm:$0xff]
        %v229 = vld [vmem:[%s2 + $0x18] sm:$0xff]
        %v230 = vld [vmem:[%s2 + $0x20] sm:$0xff]
        %v231 = vld [vmem:[%s2 + $0x28] sm:$0xff]
        %v232 = vld [vmem:[%s2 + $0x30] sm:$0xff]
        %v233 = vld [vmem:[%s2 + $0x38] sm:$0xff]
        %v234 = vld [vmem:[%s2 + $0x40] sm:$0xff]
        %v235 = vld [vmem:[%s2 + $0x48] sm:$0xff]
        %v236 = vld [vmem:[%s2 + $0x50] sm:$0xff]
        %v237 = vld [vmem:[%s2 + $0x58] sm:$0xff]
        %v238 = vld [vmem:[%s2 + $0x60] sm:$0xff]
        %v239 = vld [vmem:[%s2 + $0x68] sm:$0xff]
        %v240 = vld [vmem:[%s2 + $0x70] sm:$0xff]
        %v241 = vld [vmem:[%s2 + $0x78] sm:$0xff]
        %v242 = vld [vmem:[%s2 + $0x80] sm:$0xff]
        %v243 = vld [vmem:[%s2 + $0x88] sm:$0xff]
        %v244 = vld [vmem:[%s2 + $0x90] sm:$0xff]
        %v245 = vld [vmem:[%s2 + $0x98] sm:$0xff]
        %v246 = vld [vmem:[%s2 + $0xa0] sm:$0xff]
        %v247 = vld [vmem:[%s2 + $0xa8] sm:$0xff]
        %v248 = vld [vmem:[%s2 + $0xb0] sm:$0xff]
        %v249 = vld [vmem:[%s2 + $0xb8] sm:$0xff]
        %v250 = vld [vmem:[%s2 + $0xc0] sm:$0xff]
        %v251 = vld [vmem:[%s2 + $0xc8] sm:$0xff]
        %v252 = vld [vmem:[%s2 + $0xd0] sm:$0xff]
        %v253 = vld [vmem:[%s2 + $0xd8] sm:$0xff]
        %v254 = vld [vmem:[%s2 + $0xe0] sm:$0xff]
        %v255 = vld [vmem:[%s2 + $0xe8] sm:$0xff]
        %v256 = vld [vmem:[%s2 + $0xf0] sm:$0xff]
        %v257 = vld [vmem:[%s2 + $0xf8] sm:$0xff]
        %259 = vset.pattern.permute.xlu0 0
        %260 = vperm.xlu0 %259, %v194
        %v261 = vpop.permute.xlu0 %260
        %264 = vset.pattern.permute.xlu0 0
        %265 = vperm.xlu0 %264, %v195
        %v266 = vpop.permute.xlu0 %265
        %269 = vset.pattern.permute.xlu0 0
        %270 = vperm.xlu0 %269, %v196
        %v271 = vpop.permute.xlu0 %270
        %274 = vset.pattern.permute.xlu0 0
        %275 = vperm.xlu0 %274, %v197
        %v276 = vpop.permute.xlu0 %275
        %279 = vset.pattern.permute.xlu0 0
        %280 = vperm.xlu0 %279, %v198
        %v281 = vpop.permute.xlu0 %280
        %284 = vset.pattern.permute.xlu0 0
        %285 = vperm.xlu0 %284, %v199
        %v286 = vpop.permute.xlu0 %285
        %289 = vset.pattern.permute.xlu0 0
        %290 = vperm.xlu0 %289, %v200
        %v291 = vpop.permute.xlu0 %290
        %294 = vset.pattern.permute.xlu0 0
        %295 = vperm.xlu0 %294, %v201
        %v296 = vpop.permute.xlu0 %295
        %299 = vset.pattern.permute.xlu0 0
        %300 = vperm.xlu0 %299, %v202
        %v301 = vpop.permute.xlu0 %300
        %304 = vset.pattern.permute.xlu0 0
        %305 = vperm.xlu0 %304, %v203
        %v306 = vpop.permute.xlu0 %305
        %309 = vset.pattern.permute.xlu0 0
        %310 = vperm.xlu0 %309, %v204
        %v311 = vpop.permute.xlu0 %310
        %314 = vset.pattern.permute.xlu0 0
        %315 = vperm.xlu0 %314, %v205
        %v316 = vpop.permute.xlu0 %315
        %319 = vset.pattern.permute.xlu0 0
        %320 = vperm.xlu0 %319, %v206
        %v321 = vpop.permute.xlu0 %320
        %324 = vset.pattern.permute.xlu0 0
        %325 = vperm.xlu0 %324, %v207
        %v326 = vpop.permute.xlu0 %325
        %329 = vset.pattern.permute.xlu0 0
        %330 = vperm.xlu0 %329, %v208
        %v331 = vpop.permute.xlu0 %330
        %334 = vset.pattern.permute.xlu0 0
        %335 = vperm.xlu0 %334, %v209
        %v336 = vpop.permute.xlu0 %335
        %339 = vset.pattern.permute.xlu0 0
        %340 = vperm.xlu0 %339, %v210
        %v341 = vpop.permute.xlu0 %340
        %344 = vset.pattern.permute.xlu0 0
        %345 = vperm.xlu0 %344, %v211
        %v346 = vpop.permute.xlu0 %345
        %349 = vset.pattern.permute.xlu0 0
        %350 = vperm.xlu0 %349, %v212
        %v351 = vpop.permute.xlu0 %350
        %354 = vset.pattern.permute.xlu0 0
        %355 = vperm.xlu0 %354, %v213
        %v356 = vpop.permute.xlu0 %355
        %359 = vset.pattern.permute.xlu0 0
        %360 = vperm.xlu0 %359, %v214
        %v361 = vpop.permute.xlu0 %360
        %364 = vset.pattern.permute.xlu0 0
        %365 = vperm.xlu0 %364, %v215
        %v366 = vpop.permute.xlu0 %365
        %369 = vset.pattern.permute.xlu0 0
        %370 = vperm.xlu0 %369, %v216
        %v371 = vpop.permute.xlu0 %370
        %374 = vset.pattern.permute.xlu0 0
        %375 = vperm.xlu0 %374, %v217
        %v376 = vpop.permute.xlu0 %375
        %379 = vset.pattern.permute.xlu0 0
        %380 = vperm.xlu0 %379, %v218
        %v381 = vpop.permute.xlu0 %380
        %384 = vset.pattern.permute.xlu0 0
        %385 = vperm.xlu0 %384, %v219
        %v386 = vpop.permute.xlu0 %385
        %389 = vset.pattern.permute.xlu0 0
        %390 = vperm.xlu0 %389, %v220
        %v391 = vpop.permute.xlu0 %390
        %394 = vset.pattern.permute.xlu0 0
        %395 = vperm.xlu0 %394, %v221
        %v396 = vpop.permute.xlu0 %395
        %399 = vset.pattern.permute.xlu0 0
        %400 = vperm.xlu0 %399, %v222
        %v401 = vpop.permute.xlu0 %400
        %404 = vset.pattern.permute.xlu0 0
        %405 = vperm.xlu0 %404, %v223
        %v406 = vpop.permute.xlu0 %405
        %409 = vset.pattern.permute.xlu0 0
        %410 = vperm.xlu0 %409, %v224
        %v411 = vpop.permute.xlu0 %410
        %414 = vset.pattern.permute.xlu0 0
        %415 = vperm.xlu0 %414, %v225
        %v416 = vpop.permute.xlu0 %415
        %v418 = vlaneseq
        %v419 = vshrl.u32 %v418, 7
        %v420 = vsub.s32 0, %v419
        %v421 = vrot.slane %v193, %v420
        %v422 = vmul.f32 %v261, %v421
        %v423 = vmul.f32 %v266, %v421
        %v424 = vmul.f32 %v271, %v421
        %v425 = vmul.f32 %v276, %v421
        %v426 = vmul.f32 %v281, %v421
        %v427 = vmul.f32 %v286, %v421
        %v428 = vmul.f32 %v291, %v421
        %v429 = vmul.f32 %v296, %v421
        %v430 = vmul.f32 %v301, %v421
        %v431 = vmul.f32 %v306, %v421
        %v432 = vmul.f32 %v311, %v421
        %v433 = vmul.f32 %v316, %v421
        %v434 = vmul.f32 %v321, %v421
        %v435 = vmul.f32 %v326, %v421
        %v436 = vmul.f32 %v331, %v421
        %v437 = vmul.f32 %v336, %v421
        %v438 = vmul.f32 %v341, %v421
        %v439 = vmul.f32 %v346, %v421
        %v440 = vmul.f32 %v351, %v421
        %v441 = vmul.f32 %v356, %v421
        %v442 = vmul.f32 %v361, %v421
        %v443 = vmul.f32 %v366, %v421
        %v444 = vmul.f32 %v371, %v421
        %v445 = vmul.f32 %v376, %v421
        %v446 = vmul.f32 %v381, %v421
        %v447 = vmul.f32 %v386, %v421
        %v448 = vmul.f32 %v391, %v421
        %v449 = vmul.f32 %v396, %v421
        %v450 = vmul.f32 %v401, %v421
        %v451 = vmul.f32 %v406, %v421
        %v452 = vmul.f32 %v411, %v421
        %v453 = vmul.f32 %v416, %v421
        %455 = vset.pattern.permute.xlu0 0
        %456 = vperm.xlu0 %455, %v226
        %v457 = vpop.permute.xlu0 %456
        %460 = vset.pattern.permute.xlu0 0
        %461 = vperm.xlu0 %460, %v227
        %v462 = vpop.permute.xlu0 %461
        %465 = vset.pattern.permute.xlu0 0
        %466 = vperm.xlu0 %465, %v228
        %v467 = vpop.permute.xlu0 %466
        %470 = vset.pattern.permute.xlu0 0
        %471 = vperm.xlu0 %470, %v229
        %v472 = vpop.permute.xlu0 %471
        %475 = vset.pattern.permute.xlu0 0
        %476 = vperm.xlu0 %475, %v230
        %v477 = vpop.permute.xlu0 %476
        %480 = vset.pattern.permute.xlu0 0
        %481 = vperm.xlu0 %480, %v231
        %v482 = vpop.permute.xlu0 %481
        %485 = vset.pattern.permute.xlu0 0
        %486 = vperm.xlu0 %485, %v232
        %v487 = vpop.permute.xlu0 %486
        %490 = vset.pattern.permute.xlu0 0
        %491 = vperm.xlu0 %490, %v233
        %v492 = vpop.permute.xlu0 %491
        %495 = vset.pattern.permute.xlu0 0
        %496 = vperm.xlu0 %495, %v234
        %v497 = vpop.permute.xlu0 %496
        %500 = vset.pattern.permute.xlu0 0
        %501 = vperm.xlu0 %500, %v235
        %v502 = vpop.permute.xlu0 %501
        %505 = vset.pattern.permute.xlu0 0
        %506 = vperm.xlu0 %505, %v236
        %v507 = vpop.permute.xlu0 %506
        %510 = vset.pattern.permute.xlu0 0
        %511 = vperm.xlu0 %510, %v237
        %v512 = vpop.permute.xlu0 %511
        %515 = vset.pattern.permute.xlu0 0
        %516 = vperm.xlu0 %515, %v238
        %v517 = vpop.permute.xlu0 %516
        %520 = vset.pattern.permute.xlu0 0
        %521 = vperm.xlu0 %520, %v239
        %v522 = vpop.permute.xlu0 %521
        %525 = vset.pattern.permute.xlu0 0
        %526 = vperm.xlu0 %525, %v240
        %v527 = vpop.permute.xlu0 %526
        %530 = vset.pattern.permute.xlu0 0
        %531 = vperm.xlu0 %530, %v241
        %v532 = vpop.permute.xlu0 %531
        %535 = vset.pattern.permute.xlu0 0
        %536 = vperm.xlu0 %535, %v242
        %v537 = vpop.permute.xlu0 %536
        %540 = vset.pattern.permute.xlu0 0
        %541 = vperm.xlu0 %540, %v243
        %v542 = vpop.permute.xlu0 %541
        %545 = vset.pattern.permute.xlu0 0
        %546 = vperm.xlu0 %545, %v244
        %v547 = vpop.permute.xlu0 %546
        %550 = vset.pattern.permute.xlu0 0
        %551 = vperm.xlu0 %550, %v245
        %v552 = vpop.permute.xlu0 %551
        %555 = vset.pattern.permute.xlu0 0
        %556 = vperm.xlu0 %555, %v246
        %v557 = vpop.permute.xlu0 %556
        %560 = vset.pattern.permute.xlu0 0
        %561 = vperm.xlu0 %560, %v247
        %v562 = vpop.permute.xlu0 %561
        %565 = vset.pattern.permute.xlu0 0
        %566 = vperm.xlu0 %565, %v248
        %v567 = vpop.permute.xlu0 %566
        %570 = vset.pattern.permute.xlu0 0
        %571 = vperm.xlu0 %570, %v249
        %v572 = vpop.permute.xlu0 %571
        %575 = vset.pattern.permute.xlu0 0
        %576 = vperm.xlu0 %575, %v250
        %v577 = vpop.permute.xlu0 %576
        %580 = vset.pattern.permute.xlu0 0
        %581 = vperm.xlu0 %580, %v251
        %v582 = vpop.permute.xlu0 %581
        %585 = vset.pattern.permute.xlu0 0
        %586 = vperm.xlu0 %585, %v252
        %v587 = vpop.permute.xlu0 %586
        %590 = vset.pattern.permute.xlu0 0
        %591 = vperm.xlu0 %590, %v253
        %v592 = vpop.permute.xlu0 %591
        %595 = vset.pattern.permute.xlu0 0
        %596 = vperm.xlu0 %595, %v254
        %v597 = vpop.permute.xlu0 %596
        %600 = vset.pattern.permute.xlu0 0
        %601 = vperm.xlu0 %600, %v255
        %v602 = vpop.permute.xlu0 %601
        %605 = vset.pattern.permute.xlu0 0
        %606 = vperm.xlu0 %605, %v256
        %v607 = vpop.permute.xlu0 %606
        %610 = vset.pattern.permute.xlu0 0
        %611 = vperm.xlu0 %610, %v257
        %v612 = vpop.permute.xlu0 %611
        %v614 = vadd.f32 %v457, %v422
        %v615 = vadd.f32 %v462, %v423
        %v616 = vadd.f32 %v467, %v424
        %v617 = vadd.f32 %v472, %v425
        %v618 = vadd.f32 %v477, %v426
        %v619 = vadd.f32 %v482, %v427
        %v620 = vadd.f32 %v487, %v428
        %v621 = vadd.f32 %v492, %v429
        %v622 = vadd.f32 %v497, %v430
        %v623 = vadd.f32 %v502, %v431
        %v624 = vadd.f32 %v507, %v432
        %v625 = vadd.f32 %v512, %v433
        %v626 = vadd.f32 %v517, %v434
        %v627 = vadd.f32 %v522, %v435
        %v628 = vadd.f32 %v527, %v436
        %v629 = vadd.f32 %v532, %v437
        %v630 = vadd.f32 %v537, %v438
        %v631 = vadd.f32 %v542, %v439
        %v632 = vadd.f32 %v547, %v440
        %v633 = vadd.f32 %v552, %v441
        %v634 = vadd.f32 %v557, %v442
        %v635 = vadd.f32 %v562, %v443
        %v636 = vadd.f32 %v567, %v444
        %v637 = vadd.f32 %v572, %v445
        %v638 = vadd.f32 %v577, %v446
        %v639 = vadd.f32 %v582, %v447
        %v640 = vadd.f32 %v587, %v448
        %v641 = vadd.f32 %v592, %v449
        %v642 = vadd.f32 %v597, %v450
        %v643 = vadd.f32 %v602, %v451
        %v644 = vadd.f32 %v607, %v452
        %v645 = vadd.f32 %v612, %v453
        %646 = vset.pattern.permute.xlu0 1
        %647 = vperm.xlu0 %646, %v194
        %v648 = vpop.permute.xlu0 %647
        %650 = vset.pattern.permute.xlu0 1
        %651 = vperm.xlu0 %650, %v195
        %v652 = vpop.permute.xlu0 %651
        %654 = vset.pattern.permute.xlu0 1
        %655 = vperm.xlu0 %654, %v196
        %v656 = vpop.permute.xlu0 %655
        %658 = vset.pattern.permute.xlu0 1
        %659 = vperm.xlu0 %658, %v197
        %v660 = vpop.permute.xlu0 %659
        %662 = vset.pattern.permute.xlu0 1
        %663 = vperm.xlu0 %662, %v198
        %v664 = vpop.permute.xlu0 %663
        %666 = vset.pattern.permute.xlu0 1
        %667 = vperm.xlu0 %666, %v199
        %v668 = vpop.permute.xlu0 %667
        %670 = vset.pattern.permute.xlu0 1
        %671 = vperm.xlu0 %670, %v200
        %v672 = vpop.permute.xlu0 %671
        %674 = vset.pattern.permute.xlu0 1
        %675 = vperm.xlu0 %674, %v201
        %v676 = vpop.permute.xlu0 %675
        %678 = vset.pattern.permute.xlu0 1
        %679 = vperm.xlu0 %678, %v202
        %v680 = vpop.permute.xlu0 %679
        %682 = vset.pattern.permute.xlu0 1
        %683 = vperm.xlu0 %682, %v203
        %v684 = vpop.permute.xlu0 %683
        %686 = vset.pattern.permute.xlu0 1
        %687 = vperm.xlu0 %686, %v204
        %v688 = vpop.permute.xlu0 %687
        %690 = vset.pattern.permute.xlu0 1
        %691 = vperm.xlu0 %690, %v205
        %v692 = vpop.permute.xlu0 %691
        %694 = vset.pattern.permute.xlu0 1
        %695 = vperm.xlu0 %694, %v206
        %v696 = vpop.permute.xlu0 %695
        %698 = vset.pattern.permute.xlu0 1
        %699 = vperm.xlu0 %698, %v207
        %v700 = vpop.permute.xlu0 %699
        %702 = vset.pattern.permute.xlu0 1
        %703 = vperm.xlu0 %702, %v208
        %v704 = vpop.permute.xlu0 %703
        %706 = vset.pattern.permute.xlu0 1
        %707 = vperm.xlu0 %706, %v209
        %v708 = vpop.permute.xlu0 %707
        %710 = vset.pattern.permute.xlu0 1
        %711 = vperm.xlu0 %710, %v210
        %v712 = vpop.permute.xlu0 %711
        %714 = vset.pattern.permute.xlu0 1
        %715 = vperm.xlu0 %714, %v211
        %v716 = vpop.permute.xlu0 %715
        %718 = vset.pattern.permute.xlu0 1
        %719 = vperm.xlu0 %718, %v212
        %v720 = vpop.permute.xlu0 %719
        %722 = vset.pattern.permute.xlu0 1
        %723 = vperm.xlu0 %722, %v213
        %v724 = vpop.permute.xlu0 %723
        %726 = vset.pattern.permute.xlu0 1
        %727 = vperm.xlu0 %726, %v214
        %v728 = vpop.permute.xlu0 %727
        %730 = vset.pattern.permute.xlu0 1
        %731 = vperm.xlu0 %730, %v215
        %v732 = vpop.permute.xlu0 %731
        %734 = vset.pattern.permute.xlu0 1
        %735 = vperm.xlu0 %734, %v216
        %v736 = vpop.permute.xlu0 %735
        %738 = vset.pattern.permute.xlu0 1
        %739 = vperm.xlu0 %738, %v217
        %v740 = vpop.permute.xlu0 %739
        %742 = vset.pattern.permute.xlu0 1
        %743 = vperm.xlu0 %742, %v218
        %v744 = vpop.permute.xlu0 %743
        %746 = vset.pattern.permute.xlu0 1
        %747 = vperm.xlu0 %746, %v219
        %v748 = vpop.permute.xlu0 %747
        %750 = vset.pattern.permute.xlu0 1
        %751 = vperm.xlu0 %750, %v220
        %v752 = vpop.permute.xlu0 %751
        %754 = vset.pattern.permute.xlu0 1
        %755 = vperm.xlu0 %754, %v221
        %v756 = vpop.permute.xlu0 %755
        %758 = vset.pattern.permute.xlu0 1
        %759 = vperm.xlu0 %758, %v222
        %v760 = vpop.permute.xlu0 %759
        %762 = vset.pattern.permute.xlu0 1
        %763 = vperm.xlu0 %762, %v223
        %v764 = vpop.permute.xlu0 %763
        %766 = vset.pattern.permute.xlu0 1
        %767 = vperm.xlu0 %766, %v224
        %v768 = vpop.permute.xlu0 %767
        %770 = vset.pattern.permute.xlu0 1
        %771 = vperm.xlu0 %770, %v225
        %v772 = vpop.permute.xlu0 %771
        %v774 = vlaneseq
        %v775 = vshrl.u32 %v774, 7
        %v776 = vsub.s32 1, %v775
        %v777 = vrot.slane %v193, %v776
        %v778 = vmul.f32 %v648, %v777
        %v779 = vmul.f32 %v652, %v777
        %v780 = vmul.f32 %v656, %v777
        %v781 = vmul.f32 %v660, %v777
        %v782 = vmul.f32 %v664, %v777
        %v783 = vmul.f32 %v668, %v777
        %v784 = vmul.f32 %v672, %v777
        %v785 = vmul.f32 %v676, %v777
        %v786 = vmul.f32 %v680, %v777
        %v787 = vmul.f32 %v684, %v777
        %v788 = vmul.f32 %v688, %v777
        %v789 = vmul.f32 %v692, %v777
        %v790 = vmul.f32 %v696, %v777
        %v791 = vmul.f32 %v700, %v777
        %v792 = vmul.f32 %v704, %v777
        %v793 = vmul.f32 %v708, %v777
        %v794 = vmul.f32 %v712, %v777
        %v795 = vmul.f32 %v716, %v777
        %v796 = vmul.f32 %v720, %v777
        %v797 = vmul.f32 %v724, %v777
        %v798 = vmul.f32 %v728, %v777
        %v799 = vmul.f32 %v732, %v777
        %v800 = vmul.f32 %v736, %v777
        %v801 = vmul.f32 %v740, %v777
        %v802 = vmul.f32 %v744, %v777
        %v803 = vmul.f32 %v748, %v777
        %v804 = vmul.f32 %v752, %v777
        %v805 = vmul.f32 %v756, %v777
        %v806 = vmul.f32 %v760, %v777
        %v807 = vmul.f32 %v764, %v777
        %v808 = vmul.f32 %v768, %v777
        %v809 = vmul.f32 %v772, %v777
        %v810 = vadd.f32 %v614, %v778
        %v811 = vadd.f32 %v615, %v779
        %v812 = vadd.f32 %v616, %v780
        %v813 = vadd.f32 %v617, %v781
        %v814 = vadd.f32 %v618, %v782
        %v815 = vadd.f32 %v619, %v783
        %v816 = vadd.f32 %v620, %v784
        %v817 = vadd.f32 %v621, %v785
        %v818 = vadd.f32 %v622, %v786
        %v819 = vadd.f32 %v623, %v787
        %v820 = vadd.f32 %v624, %v788
        %v821 = vadd.f32 %v625, %v789
        %v822 = vadd.f32 %v626, %v790
        %v823 = vadd.f32 %v627, %v791
        %v824 = vadd.f32 %v628, %v792
        %v825 = vadd.f32 %v629, %v793
        %v826 = vadd.f32 %v630, %v794
        %v827 = vadd.f32 %v631, %v795
        %v828 = vadd.f32 %v632, %v796
        %v829 = vadd.f32 %v633, %v797
        %v830 = vadd.f32 %v634, %v798
        %v831 = vadd.f32 %v635, %v799
        %v832 = vadd.f32 %v636, %v800
        %v833 = vadd.f32 %v637, %v801
        %v834 = vadd.f32 %v638, %v802
        %v835 = vadd.f32 %v639, %v803
        %v836 = vadd.f32 %v640, %v804
        %v837 = vadd.f32 %v641, %v805
        %v838 = vadd.f32 %v642, %v806
        %v839 = vadd.f32 %v643, %v807
        %v840 = vadd.f32 %v644, %v808
        %v841 = vadd.f32 %v645, %v809
        %842 = vset.pattern.permute.xlu0 2
        %843 = vperm.xlu0 %842, %v194
        %v844 = vpop.permute.xlu0 %843
        %846 = vset.pattern.permute.xlu0 2
        %847 = vperm.xlu0 %846, %v195
        %v848 = vpop.permute.xlu0 %847
        %850 = vset.pattern.permute.xlu0 2
        %851 = vperm.xlu0 %850, %v196
        %v852 = vpop.permute.xlu0 %851
        %854 = vset.pattern.permute.xlu0 2
        %855 = vperm.xlu0 %854, %v197
        %v856 = vpop.permute.xlu0 %855
        %858 = vset.pattern.permute.xlu0 2
        %859 = vperm.xlu0 %858, %v198
        %v860 = vpop.permute.xlu0 %859
        %862 = vset.pattern.permute.xlu0 2
        %863 = vperm.xlu0 %862, %v199
        %v864 = vpop.permute.xlu0 %863
        %866 = vset.pattern.permute.xlu0 2
        %867 = vperm.xlu0 %866, %v200
        %v868 = vpop.permute.xlu0 %867
        %870 = vset.pattern.permute.xlu0 2
        %871 = vperm.xlu0 %870, %v201
        %v872 = vpop.permute.xlu0 %871
        %874 = vset.pattern.permute.xlu0 2
        %875 = vperm.xlu0 %874, %v202
        %v876 = vpop.permute.xlu0 %875
        %878 = vset.pattern.permute.xlu0 2
        %879 = vperm.xlu0 %878, %v203
        %v880 = vpop.permute.xlu0 %879
        %882 = vset.pattern.permute.xlu0 2
        %883 = vperm.xlu0 %882, %v204
        %v884 = vpop.permute.xlu0 %883
        %886 = vset.pattern.permute.xlu0 2
        %887 = vperm.xlu0 %886, %v205
        %v888 = vpop.permute.xlu0 %887
        %890 = vset.pattern.permute.xlu0 2
        %891 = vperm.xlu0 %890, %v206
        %v892 = vpop.permute.xlu0 %891
        %894 = vset.pattern.permute.xlu0 2
        %895 = vperm.xlu0 %894, %v207
        %v896 = vpop.permute.xlu0 %895
        %898 = vset.pattern.permute.xlu0 2
        %899 = vperm.xlu0 %898, %v208
        %v900 = vpop.permute.xlu0 %899
        %902 = vset.pattern.permute.xlu0 2
        %903 = vperm.xlu0 %902, %v209
        %v904 = vpop.permute.xlu0 %903
        %906 = vset.pattern.permute.xlu0 2
        %907 = vperm.xlu0 %906, %v210
        %v908 = vpop.permute.xlu0 %907
        %910 = vset.pattern.permute.xlu0 2
        %911 = vperm.xlu0 %910, %v211
        %v912 = vpop.permute.xlu0 %911
        %914 = vset.pattern.permute.xlu0 2
        %915 = vperm.xlu0 %914, %v212
        %v916 = vpop.permute.xlu0 %915
        %918 = vset.pattern.permute.xlu0 2
        %919 = vperm.xlu0 %918, %v213
        %v920 = vpop.permute.xlu0 %919
        %922 = vset.pattern.permute.xlu0 2
        %923 = vperm.xlu0 %922, %v214
        %v924 = vpop.permute.xlu0 %923
        %926 = vset.pattern.permute.xlu0 2
        %927 = vperm.xlu0 %926, %v215
        %v928 = vpop.permute.xlu0 %927
        %930 = vset.pattern.permute.xlu0 2
        %931 = vperm.xlu0 %930, %v216
        %v932 = vpop.permute.xlu0 %931
        %934 = vset.pattern.permute.xlu0 2
        %935 = vperm.xlu0 %934, %v217
        %v936 = vpop.permute.xlu0 %935
        %938 = vset.pattern.permute.xlu0 2
        %939 = vperm.xlu0 %938, %v218
        %v940 = vpop.permute.xlu0 %939
        %942 = vset.pattern.permute.xlu0 2
        %943 = vperm.xlu0 %942, %v219
        %v944 = vpop.permute.xlu0 %943
        %946 = vset.pattern.permute.xlu0 2
        %947 = vperm.xlu0 %946, %v220
        %v948 = vpop.permute.xlu0 %947
        %950 = vset.pattern.permute.xlu0 2
        %951 = vperm.xlu0 %950, %v221
        %v952 = vpop.permute.xlu0 %951
        %954 = vset.pattern.permute.xlu0 2
        %955 = vperm.xlu0 %954, %v222
        %v956 = vpop.permute.xlu0 %955
        %958 = vset.pattern.permute.xlu0 2
        %959 = vperm.xlu0 %958, %v223
        %v960 = vpop.permute.xlu0 %959
        %962 = vset.pattern.permute.xlu0 2
        %963 = vperm.xlu0 %962, %v224
        %v964 = vpop.permute.xlu0 %963
        %966 = vset.pattern.permute.xlu0 2
        %967 = vperm.xlu0 %966, %v225
        %v968 = vpop.permute.xlu0 %967
        %v970 = vlaneseq
        %v971 = vshrl.u32 %v970, 7
        %v972 = vsub.s32 2, %v971
        %v973 = vrot.slane %v193, %v972
        %v974 = vmul.f32 %v844, %v973
        %v975 = vmul.f32 %v848, %v973
        %v976 = vmul.f32 %v852, %v973
        %v977 = vmul.f32 %v856, %v973
        %v978 = vmul.f32 %v860, %v973
        %v979 = vmul.f32 %v864, %v973
        %v980 = vmul.f32 %v868, %v973
        %v981 = vmul.f32 %v872, %v973
        %v982 = vmul.f32 %v876, %v973
        %v983 = vmul.f32 %v880, %v973
        %v984 = vmul.f32 %v884, %v973
        %v985 = vmul.f32 %v888, %v973
        %v986 = vmul.f32 %v892, %v973
        %v987 = vmul.f32 %v896, %v973
        %v988 = vmul.f32 %v900, %v973
        %v989 = vmul.f32 %v904, %v973
        %v990 = vmul.f32 %v908, %v973
        %v991 = vmul.f32 %v912, %v973
        %v992 = vmul.f32 %v916, %v973
        %v993 = vmul.f32 %v920, %v973
        %v994 = vmul.f32 %v924, %v973
        %v995 = vmul.f32 %v928, %v973
        %v996 = vmul.f32 %v932, %v973
        %v997 = vmul.f32 %v936, %v973
        %v998 = vmul.f32 %v940, %v973
        %v999 = vmul.f32 %v944, %v973
        %v1000 = vmul.f32 %v948, %v973
        %v1001 = vmul.f32 %v952, %v973
        %v1002 = vmul.f32 %v956, %v973
        %v1003 = vmul.f32 %v960, %v973
        %v1004 = vmul.f32 %v964, %v973
        %v1005 = vmul.f32 %v968, %v973
        %v1006 = vadd.f32 %v810, %v974
        %v1007 = vadd.f32 %v811, %v975
        %v1008 = vadd.f32 %v812, %v976
        %v1009 = vadd.f32 %v813, %v977
        %v1010 = vadd.f32 %v814, %v978
        %v1011 = vadd.f32 %v815, %v979
        %v1012 = vadd.f32 %v816, %v980
        %v1013 = vadd.f32 %v817, %v981
        %v1014 = vadd.f32 %v818, %v982
        %v1015 = vadd.f32 %v819, %v983
        %v1016 = vadd.f32 %v820, %v984
        %v1017 = vadd.f32 %v821, %v985
        %v1018 = vadd.f32 %v822, %v986
        %v1019 = vadd.f32 %v823, %v987
        %v1020 = vadd.f32 %v824, %v988
        %v1021 = vadd.f32 %v825, %v989
        %v1022 = vadd.f32 %v826, %v990
        %v1023 = vadd.f32 %v827, %v991
        %v1024 = vadd.f32 %v828, %v992
        %v1025 = vadd.f32 %v829, %v993
        %v1026 = vadd.f32 %v830, %v994
        %v1027 = vadd.f32 %v831, %v995
        %v1028 = vadd.f32 %v832, %v996
        %v1029 = vadd.f32 %v833, %v997
        %v1030 = vadd.f32 %v834, %v998
        %v1031 = vadd.f32 %v835, %v999
        %v1032 = vadd.f32 %v836, %v1000
        %v1033 = vadd.f32 %v837, %v1001
        %v1034 = vadd.f32 %v838, %v1002
        %v1035 = vadd.f32 %v839, %v1003
        %v1036 = vadd.f32 %v840, %v1004
        %v1037 = vadd.f32 %v841, %v1005
        %1038 = vset.pattern.permute.xlu0 3
        %1039 = vperm.xlu0 %1038, %v194
        %v1040 = vpop.permute.xlu0 %1039
        %1042 = vset.pattern.permute.xlu0 3
        %1043 = vperm.xlu0 %1042, %v195
        %v1044 = vpop.permute.xlu0 %1043
        %1046 = vset.pattern.permute.xlu0 3
        %1047 = vperm.xlu0 %1046, %v196
        %v1048 = vpop.permute.xlu0 %1047
        %1050 = vset.pattern.permute.xlu0 3
        %1051 = vperm.xlu0 %1050, %v197
        %v1052 = vpop.permute.xlu0 %1051
        %1054 = vset.pattern.permute.xlu0 3
        %1055 = vperm.xlu0 %1054, %v198
        %v1056 = vpop.permute.xlu0 %1055
        %1058 = vset.pattern.permute.xlu0 3
        %1059 = vperm.xlu0 %1058, %v199
        %v1060 = vpop.permute.xlu0 %1059
        %1062 = vset.pattern.permute.xlu0 3
        %1063 = vperm.xlu0 %1062, %v200
        %v1064 = vpop.permute.xlu0 %1063
        %1066 = vset.pattern.permute.xlu0 3
        %1067 = vperm.xlu0 %1066, %v201
        %v1068 = vpop.permute.xlu0 %1067
        %1070 = vset.pattern.permute.xlu0 3
        %1071 = vperm.xlu0 %1070, %v202
        %v1072 = vpop.permute.xlu0 %1071
        %1074 = vset.pattern.permute.xlu0 3
        %1075 = vperm.xlu0 %1074, %v203
        %v1076 = vpop.permute.xlu0 %1075
        %1078 = vset.pattern.permute.xlu0 3
        %1079 = vperm.xlu0 %1078, %v204
        %v1080 = vpop.permute.xlu0 %1079
        %1082 = vset.pattern.permute.xlu0 3
        %1083 = vperm.xlu0 %1082, %v205
        %v1084 = vpop.permute.xlu0 %1083
        %1086 = vset.pattern.permute.xlu0 3
        %1087 = vperm.xlu0 %1086, %v206
        %v1088 = vpop.permute.xlu0 %1087
        %1090 = vset.pattern.permute.xlu0 3
        %1091 = vperm.xlu0 %1090, %v207
        %v1092 = vpop.permute.xlu0 %1091
        %1094 = vset.pattern.permute.xlu0 3
        %1095 = vperm.xlu0 %1094, %v208
        %v1096 = vpop.permute.xlu0 %1095
        %1098 = vset.pattern.permute.xlu0 3
        %1099 = vperm.xlu0 %1098, %v209
        %v1100 = vpop.permute.xlu0 %1099
        %1102 = vset.pattern.permute.xlu0 3
        %1103 = vperm.xlu0 %1102, %v210
        %v1104 = vpop.permute.xlu0 %1103
        %1106 = vset.pattern.permute.xlu0 3
        %1107 = vperm.xlu0 %1106, %v211
        %v1108 = vpop.permute.xlu0 %1107
        %1110 = vset.pattern.permute.xlu0 3
        %1111 = vperm.xlu0 %1110, %v212
        %v1112 = vpop.permute.xlu0 %1111
        %1114 = vset.pattern.permute.xlu0 3
        %1115 = vperm.xlu0 %1114, %v213
        %v1116 = vpop.permute.xlu0 %1115
        %1118 = vset.pattern.permute.xlu0 3
        %1119 = vperm.xlu0 %1118, %v214
        %v1120 = vpop.permute.xlu0 %1119
        %1122 = vset.pattern.permute.xlu0 3
        %1123 = vperm.xlu0 %1122, %v215
        %v1124 = vpop.permute.xlu0 %1123
        %1126 = vset.pattern.permute.xlu0 3
        %1127 = vperm.xlu0 %1126, %v216
        %v1128 = vpop.permute.xlu0 %1127
        %1130 = vset.pattern.permute.xlu0 3
        %1131 = vperm.xlu0 %1130, %v217
        %v1132 = vpop.permute.xlu0 %1131
        %1134 = vset.pattern.permute.xlu0 3
        %1135 = vperm.xlu0 %1134, %v218
        %v1136 = vpop.permute.xlu0 %1135
        %1138 = vset.pattern.permute.xlu0 3
        %1139 = vperm.xlu0 %1138, %v219
        %v1140 = vpop.permute.xlu0 %1139
        %1142 = vset.pattern.permute.xlu0 3
        %1143 = vperm.xlu0 %1142, %v220
        %v1144 = vpop.permute.xlu0 %1143
        %1146 = vset.pattern.permute.xlu0 3
        %1147 = vperm.xlu0 %1146, %v221
        %v1148 = vpop.permute.xlu0 %1147
        %1150 = vset.pattern.permute.xlu0 3
        %1151 = vperm.xlu0 %1150, %v222
        %v1152 = vpop.permute.xlu0 %1151
        %1154 = vset.pattern.permute.xlu0 3
        %1155 = vperm.xlu0 %1154, %v223
        %v1156 = vpop.permute.xlu0 %1155
        %1158 = vset.pattern.permute.xlu0 3
        %1159 = vperm.xlu0 %1158, %v224
        %v1160 = vpop.permute.xlu0 %1159
        %1162 = vset.pattern.permute.xlu0 3
        %1163 = vperm.xlu0 %1162, %v225
        %v1164 = vpop.permute.xlu0 %1163
        %v1166 = vlaneseq
        %v1167 = vshrl.u32 %v1166, 7
        %v1168 = vsub.s32 3, %v1167
        %v1169 = vrot.slane %v193, %v1168
        %v1170 = vmul.f32 %v1040, %v1169
        %v1171 = vmul.f32 %v1044, %v1169
        %v1172 = vmul.f32 %v1048, %v1169
        %v1173 = vmul.f32 %v1052, %v1169
        %v1174 = vmul.f32 %v1056, %v1169
        %v1175 = vmul.f32 %v1060, %v1169
        %v1176 = vmul.f32 %v1064, %v1169
        %v1177 = vmul.f32 %v1068, %v1169
        %v1178 = vmul.f32 %v1072, %v1169
        %v1179 = vmul.f32 %v1076, %v1169
        %v1180 = vmul.f32 %v1080, %v1169
        %v1181 = vmul.f32 %v1084, %v1169
        %v1182 = vmul.f32 %v1088, %v1169
        %v1183 = vmul.f32 %v1092, %v1169
        %v1184 = vmul.f32 %v1096, %v1169
        %v1185 = vmul.f32 %v1100, %v1169
        %v1186 = vmul.f32 %v1104, %v1169
        %v1187 = vmul.f32 %v1108, %v1169
        %v1188 = vmul.f32 %v1112, %v1169
        %v1189 = vmul.f32 %v1116, %v1169
        %v1190 = vmul.f32 %v1120, %v1169
        %v1191 = vmul.f32 %v1124, %v1169
        %v1192 = vmul.f32 %v1128, %v1169
        %v1193 = vmul.f32 %v1132, %v1169
        %v1194 = vmul.f32 %v1136, %v1169
        %v1195 = vmul.f32 %v1140, %v1169
        %v1196 = vmul.f32 %v1144, %v1169
        %v1197 = vmul.f32 %v1148, %v1169
        %v1198 = vmul.f32 %v1152, %v1169
        %v1199 = vmul.f32 %v1156, %v1169
        %v1200 = vmul.f32 %v1160, %v1169
        %v1201 = vmul.f32 %v1164, %v1169
        %v1202 = vadd.f32 %v1006, %v1170
        %v1203 = vadd.f32 %v1007, %v1171
        %v1204 = vadd.f32 %v1008, %v1172
        %v1205 = vadd.f32 %v1009, %v1173
        %v1206 = vadd.f32 %v1010, %v1174
        %v1207 = vadd.f32 %v1011, %v1175
        %v1208 = vadd.f32 %v1012, %v1176
        %v1209 = vadd.f32 %v1013, %v1177
        %v1210 = vadd.f32 %v1014, %v1178
        %v1211 = vadd.f32 %v1015, %v1179
        %v1212 = vadd.f32 %v1016, %v1180
        %v1213 = vadd.f32 %v1017, %v1181
        %v1214 = vadd.f32 %v1018, %v1182
        %v1215 = vadd.f32 %v1019, %v1183
        %v1216 = vadd.f32 %v1020, %v1184
        %v1217 = vadd.f32 %v1021, %v1185
        %v1218 = vadd.f32 %v1022, %v1186
        %v1219 = vadd.f32 %v1023, %v1187
        %v1220 = vadd.f32 %v1024, %v1188
        %v1221 = vadd.f32 %v1025, %v1189
        %v1222 = vadd.f32 %v1026, %v1190
        %v1223 = vadd.f32 %v1027, %v1191
        %v1224 = vadd.f32 %v1028, %v1192
        %v1225 = vadd.f32 %v1029, %v1193
        %v1226 = vadd.f32 %v1030, %v1194
        %v1227 = vadd.f32 %v1031, %v1195
        %v1228 = vadd.f32 %v1032, %v1196
        %v1229 = vadd.f32 %v1033, %v1197
        %v1230 = vadd.f32 %v1034, %v1198
        %v1231 = vadd.f32 %v1035, %v1199
        %v1232 = vadd.f32 %v1036, %v1200
        %v1233 = vadd.f32 %v1037, %v1201
        %v1234 = vmax.f32 %v1202, 0.0
        %v1235 = vmax.f32 %v1203, 0.0
        %v1236 = vmax.f32 %v1204, 0.0
        %v1237 = vmax.f32 %v1205, 0.0
        %v1238 = vmax.f32 %v1206, 0.0
        %v1239 = vmax.f32 %v1207, 0.0
        %v1240 = vmax.f32 %v1208, 0.0
        %v1241 = vmax.f32 %v1209, 0.0
        %v1242 = vmax.f32 %v1210, 0.0
        %v1243 = vmax.f32 %v1211, 0.0
        %v1244 = vmax.f32 %v1212, 0.0
        %v1245 = vmax.f32 %v1213, 0.0
        %v1246 = vmax.f32 %v1214, 0.0
        %v1247 = vmax.f32 %v1215, 0.0
        %v1248 = vmax.f32 %v1216, 0.0
        %v1249 = vmax.f32 %v1217, 0.0
        %v1250 = vmax.f32 %v1218, 0.0
        %v1251 = vmax.f32 %v1219, 0.0
        %v1252 = vmax.f32 %v1220, 0.0
        %v1253 = vmax.f32 %v1221, 0.0
        %v1254 = vmax.f32 %v1222, 0.0
        %v1255 = vmax.f32 %v1223, 0.0
        %v1256 = vmax.f32 %v1224, 0.0
        %v1257 = vmax.f32 %v1225, 0.0
        %v1258 = vmax.f32 %v1226, 0.0
        %v1259 = vmax.f32 %v1227, 0.0
        %v1260 = vmax.f32 %v1228, 0.0
        %v1261 = vmax.f32 %v1229, 0.0
        %v1262 = vmax.f32 %v1230, 0.0
        %v1263 = vmax.f32 %v1231, 0.0
        %v1264 = vmax.f32 %v1232, 0.0
        %v1265 = vmax.f32 %v1233, 0.0
        %v1266 = vld [vmem:[%s3] sm:$0xff]
        %v1267 = vld [vmem:[%s3 + $0x8] sm:$0xff]
        %1268 = vmatprep.subr.mxu0 0.0
        %1269 = vmatpush1.msra.mxu0 %v1249
        %1270 = vmatprep.subr.mxu0 0.0
        %1271 = vmatpush1.msra.mxu0 %v1248
        %1272 = vmatprep.subr.mxu0 0.0
        %1273 = vmatpush1.msra.mxu0 %v1247
        %1274 = vmatprep.subr.mxu0 0.0
        %1275 = vmatpush1.msra.mxu0 %v1246
        %1276 = vmatprep.subr.mxu0 0.0
        %1277 = vmatpush1.msra.mxu0 %v1245
        %1278 = vmatprep.subr.mxu0 0.0
        %1279 = vmatpush1.msra.mxu0 %v1244
        %1280 = vmatprep.subr.mxu0 0.0
        %1281 = vmatpush1.msra.mxu0 %v1243
        %1282 = vmatprep.subr.mxu0 0.0
        %1283 = vmatpush1.msra.mxu0 %v1242
        %1284 = vmatprep.subr.mxu0 0.0
        %1285 = vmatpush1.msra.mxu0 %v1241
        %1286 = vmatprep.subr.mxu0 0.0
        %1287 = vmatpush1.msra.mxu0 %v1240
        %1288 = vmatprep.subr.mxu0 0.0
        %1289 = vmatpush1.msra.mxu0 %v1239
        %1290 = vmatprep.subr.mxu0 0.0
        %1291 = vmatpush1.msra.mxu0 %v1238
        %1292 = vmatprep.subr.mxu0 0.0
        %1293 = vmatpush1.msra.mxu0 %v1237
        %1294 = vmatprep.subr.mxu0 0.0
        %1295 = vmatpush1.msra.mxu0 %v1236
        %1296 = vmatprep.subr.mxu0 0.0
        %1297 = vmatpush1.msra.mxu0 %v1235
        %1298 = vmatprep.subr.mxu0 0.0
        %1299 = vmatpush1.msra.mxu0 %v1234
        %1300 = vmatprep.subr.mxu0 0.0
        %1301 = vmatpush2.msra.mxu0 %v1265
        %1302 = vmatprep.subr.mxu0 0.0
        %1303 = vmatpush2.msra.mxu0 %v1264
        %1304 = vmatprep.subr.mxu0 0.0
        %1305 = vmatpush2.msra.mxu0 %v1263
        %1306 = vmatprep.subr.mxu0 0.0
        %1307 = vmatpush2.msra.mxu0 %v1262
        %1308 = vmatprep.subr.mxu0 0.0
        %1309 = vmatpush2.msra.mxu0 %v1261
        %1310 = vmatprep.subr.mxu0 0.0
        %1311 = vmatpush2.msra.mxu0 %v1260
        %1312 = vmatprep.subr.mxu0 0.0
        %1313 = vmatpush2.msra.mxu0 %v1259
        %1314 = vmatprep.subr.mxu0 0.0
        %1315 = vmatpush2.msra.mxu0 %v1258
        %1316 = vmatprep.subr.mxu0 0.0
        %1317 = vmatpush2.msra.mxu0 %v1257
        %1318 = vmatprep.subr.mxu0 0.0
        %1319 = vmatpush2.msra.mxu0 %v1256
        %1320 = vmatprep.subr.mxu0 0.0
        %1321 = vmatpush2.msra.mxu0 %v1255
        %1322 = vmatprep.subr.mxu0 0.0
        %1323 = vmatpush2.msra.mxu0 %v1254
        %1324 = vmatprep.subr.mxu0 0.0
        %1325 = vmatpush2.msra.mxu0 %v1253
        %1326 = vmatprep.subr.mxu0 0.0
        %1327 = vmatpush2.msra.mxu0 %v1252
        %1328 = vmatprep.subr.mxu0 0.0
        %1329 = vmatpush2.msra.mxu0 %v1251
        %1330 = vmatprep.subr.mxu0 0.0
        %1331 = vmatpush2.msra.mxu0 %v1250
        %1332 = vmatprep.mubr.f32.mxu0 %v1267
        %1333 = vmatmul.mubr.f32.gmra.mxu0 %v1266
        %v1334 = vpop.f32.mrf.mxu0
        %v1335 = vadd.f32 0.0, %v1334
        %v1336 = vpop.f32.mrf.mxu0
        %1337 = vdwg.mxu0
        %1338 = vst [vmem:[%s188] sm:$0xff] %v1335
        %s1339 = sand.u32 %s115, 1
        %s1340 = scalar_lea.sflag [#allocation3], %s1339
        %s1341 = sand.u32 %s115, 1
        %s1342 = smul.addr %s1341, 8
        %s1343 = scalar_lea.vmem [#allocation2], %s1342
        // Predicated region
        $region37: #{tpu_custom_call.1} parent=35 // pred_check
          %p1344 = pneg %p125
        $region38: #{tpu_custom_call.1} parent=35 // pred_check_branch
          %1346 = sbr.rel (%p1344) target = $region40
        $region39: #{tpu_custom_call.1} parent=35 // pred_region
          %s1348 = ssub.s32 128, 128
          %1349 = vsyncadd %s1340, %s1348
          %s1350 = smul.addr %s18, 128
          %s1351 = scalar_lea.hbm %s4, %s1350
          %s1353 = sshll.u32 %s1343, 4
          %s1354 = int_to_ptr.vmem [resolvable:$true] %s1353
          %1356 = dma.vmem_to_hbm [thread:$0]  %s1354, 128, %s1351, %s1340
        $region40: #{tpu_custom_call.1} parent=35 // pred_fallthru
          _
      $region36: #{tpu_custom_call.1} parent=5 // pred_fallthru
        _
      %p1357 = scmp.le.s32.totalorder 2, %s13
      // Predicated region
      $region41: #{tpu_custom_call.1} parent=5 // pred_check
        %p1358 = pneg %p1357
      $region42: #{tpu_custom_call.1} parent=5 // pred_check_branch
        %1360 = sbr.rel (%p1358) target = $region44
      $region43: #{tpu_custom_call.1} parent=5 // pred_region
        %s1361 = ssub.s32 %s13, 2
        // Predicated region
        $region45: #{tpu_custom_call.1} parent=43 // pred_check
          %p1362 = pneg %p131
        $region46: #{tpu_custom_call.1} parent=43 // pred_check_branch
          %1364 = sbr.rel (%p1362) target = $region48
        $region47: #{tpu_custom_call.1} parent=43 // pred_region
          %s1365 = sand.u32 %s116, 1
          %s1366 = scalar_lea.sflag [#allocation3], %s1365
          %s1367 = sand.u32 %s116, 1
          %s1368 = smul.addr %s1367, 8
          %s1369 = scalar_lea.vmem [#allocation2], %s1368
          %1370 = dma.done %s1366, 128
        $region48: #{tpu_custom_call.1} parent=43 // pred_fallthru
          _
      $region44: #{tpu_custom_call.1} parent=5 // pred_fallthru
        _
    $region6: #{tpu_custom_call.1} parent=1 // loop_footer
      %s17 = sadd.s32 1, %s13
    $region7: #{tpu_custom_call.1} parent=1 // loop_footer_branch
      %12 = sbr.rel target = $region3
    $region8: #{tpu_custom_call.1} parent=1 // loop_exit
      _
    %1371 = vsyncpa [#allocation3], 1
    %s1372 = scalar_lea.sflag [#allocation3], 1
    %1373 = vsyncpa %s1372, 1

</llo_original>
